<compile_context>
chip_gen: v6e
topology: v6e:2x2x1
jax: 0.10.0
libtpu: 0.0.40
codegen_flags: <defaults>
</compile_context>

<pallas_src>
import functools

import jax
import jax.numpy as jnp
from jax import lax
from jax.experimental import pallas as pl
from jax.experimental.pallas import tpu as pltpu

_LANE = 128
_MAX_TILE_HW = 32768  # lanes; amortizes ~0.35us/grid-step overhead


def _vmem_budget():
    """(vmem_capacity_bytes, tile_budget_bytes) for the current generation."""
    try:
        cap = int(pltpu.get_tpu_info().vmem_capacity_bytes)
    except Exception:
        cap = 64 * 1024 * 1024  # conservative (v7x) fallback
    return cap, (cap * 3) // 8  # 24 MiB on 64 MiB parts, 48 MiB on 128 MiB


# --------------------------------------------------------------------------
# Fused single-call kernel (HW fits one VMEM tile per batch element).
# --------------------------------------------------------------------------
def _fused_kernel(x_ref, wd_ref, bd_ref, w1t_ref, w2_ref, o_ref, *, inv_hw):
    """x:(Cin,HW) wd:(Cout,Cin) bd:(Cout,1) w1t:(Cout,Chid) w2:(Cout,Chid)."""
    y = jnp.dot(wd_ref[...], x_ref[...], preferred_element_type=jnp.float32)
    y = y + bd_ref[...]                                    # (Cout, HW) f32

    avg = jnp.sum(y, axis=-1, keepdims=True) * inv_hw      # (Cout, 1)
    mx = jnp.max(y, axis=-1, keepdims=True)                # (Cout, 1)

    def fc(v):  # (Cout,1) -> (Cout,1); tiny, stays on VPU/XLU (no dim-1 dots)
        h = jnp.maximum(jnp.sum(w1t_ref[...] * v, axis=0, keepdims=True), 0.0)
        return jnp.sum(w2_ref[...] * h, axis=1, keepdims=True)

    att = jax.nn.sigmoid(fc(avg) + fc(mx))                 # (Cout, 1)
    o_ref[...] = (y * att).astype(o_ref.dtype)


# --------------------------------------------------------------------------
# Two-pass kernels (large HW).
# --------------------------------------------------------------------------
def _pool_kernel(x_ref, wd_ref, sum_ref, max_ref, *,
                 hw, thw, nt_half, first_masked, needs_mask):
    """Pass 1: per-tile 1x1 conv (no bias) + running per-channel sum / max.

    Grid (N, NSHARDS, NT_half); sum/max are resident per (n, shard).
    """
    c = pl.program_id(1)
    t = pl.program_id(2)
    gt = c * nt_half + t                                   # global tile index

    y = jnp.dot(wd_ref[...], x_ref[...], preferred_element_type=jnp.float32)

    @pl.when(t == 0)
    def _():
        sum_ref[...] = jnp.zeros_like(sum_ref)
        max_ref[...] = jnp.full_like(max_ref, -jnp.inf)

    if needs_mask:
        @pl.when(gt < first_masked)                        # full tiles: no mask
        def _():
            sum_ref[...] = sum_ref[...] + jnp.sum(y, axis=-1, keepdims=True)
            max_ref[...] = jnp.maximum(
                max_ref[...], jnp.max(y, axis=-1, keepdims=True))

        @pl.when(gt >= first_masked)                       # partial / padded tiles
        def _():
            col = gt * thw + lax.broadcasted_iota(jnp.int32, (1, thw), 1)
            valid = col < hw
            sum_ref[...] = sum_ref[...] + jnp.sum(
                jnp.where(valid, y, 0.0), axis=-1, keepdims=True)
            max_ref[...] = jnp.maximum(
                max_ref[...],
                jnp.max(jnp.where(valid, y, -jnp.inf), axis=-1, keepdims=True))
    else:
        sum_ref[...] = sum_ref[...] + jnp.sum(y, axis=-1, keepdims=True)
        max_ref[...] = jnp.maximum(
            max_ref[...], jnp.max(y, axis=-1, keepdims=True))


def _scale_kernel(x_ref, wdn_ref, bdn_ref, o_ref):
    """Pass 2: y = (att*W) x + att*b  (attention pre-folded into weights)."""
    y = jnp.dot(wdn_ref[...], x_ref[...], preferred_element_type=jnp.float32)
    o_ref[...] = (y + bdn_ref[...]).astype(o_ref.dtype)


# --------------------------------------------------------------------------
# Wrapper
# --------------------------------------------------------------------------
def ccm_forward(x_nchw, w_down, b_down, w_fc1, w_fc2, *, force_tile_hw=None):
    """x_nchw: (N, Cin, H, W); weights follow PyTorch Conv2d conventions:
       w_down: (Cout, Cin, 1, 1), b_down: (Cout,),
       w_fc1: (Chid, Cout, 1, 1), w_fc2: (Cout, Chid, 1, 1)."""
    N, Cin, H, W = x_nchw.shape
    Cout = w_down.shape[0]
    Chid = w_fc1.shape[0]
    HW = H * W

    out_dtype = x_nchw.dtype
    cdtype = out_dtype if jnp.issubdtype(out_dtype, jnp.floating) else jnp.float32

    # Free reshapes only; x stays in its native dtype (no HBM-side upcast).
    x_rows = x_nchw.reshape(N, Cin, HW).astype(cdtype)
    wd32 = w_down.reshape(Cout, Cin).astype(jnp.float32)
    bd32 = b_down.reshape(Cout).astype(jnp.float32)
    w1 = w_fc1.reshape(Chid, Cout).astype(jnp.float32)
    w2 = w_fc2.reshape(Cout, Chid).astype(jnp.float32)
    wd_c = wd32.astype(cdtype)

    x_bytes = jnp.dtype(cdtype).itemsize
    o_bytes = jnp.dtype(out_dtype).itemsize
    vmem_cap, tile_budget = _vmem_budget()

    # Adaptive lane tile: double-buffered in + out tiles must fit the budget.
    per_lane = 2 * (Cin * x_bytes + Cout * o_bytes)
    if force_tile_hw is not None:
        thw = min(int(force_tile_hw), HW)
        if thw < HW:
            thw = max((thw // _LANE) * _LANE, _LANE)
    else:
        thw = tile_budget // max(per_lane, 1)
        thw = max((min(thw, _MAX_TILE_HW) // _LANE) * _LANE, _LANE)
        if thw >= HW:
            thw = HW
    nt_used = pl.cdiv(HW, thw)

    tile_bytes = 2 * thw * (Cin * x_bytes + Cout * o_bytes)
    vmem_limit = int(min(vmem_cap, max(tile_bytes + (16 << 20), 32 << 20)))

    # ---------------- Fused single-kernel path (small HW) ----------------
    if nt_used == 1:
        out_rows = pl.pallas_call(
            functools.partial(_fused_kernel, inv_hw=1.0 / float(HW)),
            out_shape=jax.ShapeDtypeStruct((N, Cout, HW), out_dtype),
            grid=(N,),
            in_specs=[
                pl.BlockSpec((None, Cin, HW), lambda n: (n, 0, 0)),
                pl.BlockSpec((Cout, Cin), lambda n: (0, 0)),
                pl.BlockSpec((Cout, 1), lambda n: (0, 0)),
                pl.BlockSpec((Cout, Chid), lambda n: (0, 0)),
                pl.BlockSpec((Cout, Chid), lambda n: (0, 0)),
            ],
            out_specs=pl.BlockSpec((None, Cout, HW), lambda n: (n, 0, 0)),
            compiler_params=pltpu.CompilerParams(
                dimension_semantics=("parallel",),
                vmem_limit_bytes=vmem_limit),
        )(x_rows, wd_c, bd32.reshape(Cout, 1), w1.T, w2)
        return out_rows.reshape(N, Cout, H, W)

    # ---------------- Two-pass path (large HW) ----------------------------
    # Pass 1: conv + global sum/max pooling, HW reduction split in 2 shards
    # so both v7x TensorCores get work even when N is tiny.
    nshards = 2 if nt_used >= 2 else 1
    nt_half = pl.cdiv(nt_used, nshards)
    has_partial = (HW % thw) != 0
    needs_mask = has_partial or (nshards * nt_half > nt_used)
    first_masked = nt_used - 1 if has_partial else nt_used

    def _x_map_p1(n, c, t):
        # Clamp padded shard tiles onto the last real block (their contribution
        # is masked away inside the kernel).
        return (n, 0, jnp.minimum(c * nt_half + t, nt_used - 1))

    sum_out, max_out = pl.pallas_call(
        functools.partial(_pool_kernel, hw=HW, thw=thw, nt_half=nt_half,
                          first_masked=first_masked, needs_mask=needs_mask),
        out_shape=(
            jax.ShapeDtypeStruct((N, nshards, Cout, 1), jnp.float32),
            jax.ShapeDtypeStruct((N, nshards, Cout, 1), jnp.float32),
        ),
        grid=(N, nshards, nt_half),
        in_specs=[
            pl.BlockSpec((None, Cin, thw), _x_map_p1),
            pl.BlockSpec((Cout, Cin), lambda n, c, t: (0, 0)),
        ],
        out_specs=(
            pl.BlockSpec((None, None, Cout, 1), lambda n, c, t: (n, c, 0, 0)),
            pl.BlockSpec((None, None, Cout, 1), lambda n, c, t: (n, c, 0, 0)),
        ),
        compiler_params=pltpu.CompilerParams(
            dimension_semantics=("parallel", "parallel", "arbitrary"),
            vmem_limit_bytes=vmem_limit),
    )(x_rows, wd_c)

    # Combine shards, re-apply the bias analytically, run the tiny MLP in XLA.
    s = jnp.sum(sum_out[..., 0], axis=1)                   # (N, Cout)
    m = jnp.max(max_out[..., 0], axis=1)                   # (N, Cout)
    avg = s * (1.0 / float(HW)) + bd32[None, :]
    mx = m + bd32[None, :]

    def fc(v):
        h = jnp.maximum(jnp.einsum("nc,hc->nh", v, w1), 0.0)
        return jnp.einsum("nh,oh->no", h, w2)

    att = jax.nn.sigmoid(fc(avg) + fc(mx))                 # (N, Cout) f32

    # Fold attention into per-batch conv weights / bias for pass 2.
    wdn = (att[:, :, None] * wd32[None]).astype(cdtype)    # (N, Cout, Cin)
    bdn = (att * bd32[None, :])[..., None]                  # (N, Cout, 1) f32

    out_rows = pl.pallas_call(
        _scale_kernel,
        out_shape=jax.ShapeDtypeStruct((N, Cout, HW), out_dtype),
        grid=(N, nt_used),
        in_specs=[
            pl.BlockSpec((None, Cin, thw), lambda n, t: (n, 0, t)),
            pl.BlockSpec((None, Cout, Cin), lambda n, t: (n, 0, 0)),
            pl.BlockSpec((None, Cout, 1), lambda n, t: (n, 0, 0)),
        ],
        out_specs=pl.BlockSpec((None, Cout, thw), lambda n, t: (n, 0, t)),
        compiler_params=pltpu.CompilerParams(
            dimension_semantics=("parallel", "parallel"),
            vmem_limit_bytes=vmem_limit),
    )(x_rows, wdn, bdn)

    return out_rows.reshape(N, Cout, H, W)


def ccm_reference(x_nchw, w_down, b_down, w_fc1, w_fc2):
    """Pure-JAX reference mirroring the PyTorch forward (f32)."""
    N, Cin, H, W = x_nchw.shape
    Cout = w_down.shape[0]
    Chid = w_fc1.shape[0]
    wd = w_down.reshape(Cout, Cin).astype(jnp.float32)
    w1 = w_fc1.reshape(Chid, Cout).astype(jnp.float32)
    w2 = w_fc2.reshape(Cout, Chid).astype(jnp.float32)
    xr = jnp.transpose(x_nchw.astype(jnp.float32), (0, 2, 3, 1)).reshape(N, H * W, Cin)
    y = jnp.einsum("npc,oc->npo", xr, wd) + b_down[None, None, :]
    avg = jnp.mean(y, axis=1)
    mx = jnp.max(y, axis=1)

    def fc(v):
        h = jnp.maximum(jnp.einsum("nc,hc->nh", v, w1), 0.0)
        return jnp.einsum("nh,oh->no", h, w2)

    w = jax.nn.sigmoid(fc(avg) + fc(mx))
    out = y * w[:, None, :]
    return jnp.transpose(out.reshape(N, H, W, Cout), (0, 3, 1, 2))


if __name__ == "__main__":
    # CCM(infeature=8, out=8, redio=4), input (2, 8, 16, 16)
    N, Cin, H, W = 2, 8, 16, 16
    Cout, ratio = 8, 4
    Chid = max(Cout // ratio, 1)

    key = jax.random.PRNGKey(0)
    k_x, k_wd, k_bd, k_w1, k_w2, k_x2 = jax.random.split(key, 6)

    x = jax.random.normal(k_x, (N, Cin, H, W), dtype=jnp.float32)
    w_down = jax.random.normal(k_wd, (Cout, Cin, 1, 1), dtype=jnp.float32) * 0.2
    b_down = jax.random.normal(k_bd, (Cout,), dtype=jnp.float32) * 0.1
    w_fc1 = jax.random.normal(k_w1, (Chid, Cout, 1, 1), dtype=jnp.float32) * 0.3
    w_fc2 = jax.random.normal(k_w2, (Cout, Chid, 1, 1), dtype=jnp.float32) * 0.3

    ref = jax.block_until_ready(ccm_reference(x, w_down, b_down, w_fc1, w_fc2))

    # 1) Fused single-kernel path (small HW), f32.
    out = jax.block_until_ready(ccm_forward(x, w_down, b_down, w_fc1, w_fc2))
    assert out.shape == (N, Cout, H, W), out.shape
    assert jnp.allclose(out, ref, atol=1e-4, rtol=1e-4), (
        float(jnp.max(jnp.abs(out - ref))))

    # 2) Two-pass tiled path with a partial last tile (forced small tile).
    x2 = jax.random.normal(k_x2, (1, Cin, 20, 20), dtype=jnp.float32)
    ref2 = jax.block_until_ready(ccm_reference(x2, w_down, b_down, w_fc1, w_fc2))
    out2 = jax.block_until_ready(
        ccm_forward(x2, w_down, b_down, w_fc1, w_fc2, force_tile_hw=128))
    assert out2.shape == (1, Cout, 20, 20), out2.shape
    assert jnp.allclose(out2, ref2, atol=1e-4, rtol=1e-4), (
        float(jnp.max(jnp.abs(out2 - ref2))))

    # 3) bf16 activations through the fused path (bandwidth-optimal dtype).
    out_bf = jax.block_until_ready(
        ccm_forward(x.astype(jnp.bfloat16), w_down, b_down, w_fc1, w_fc2))
    assert out_bf.dtype == jnp.bfloat16
    assert jnp.allclose(out_bf.astype(jnp.float32), ref, atol=1.5e-1, rtol=1.5e-1)

    print("KERNEL_OK")
</pallas_src>

<mosaic_0001>
module attributes {stable_mosaic.version = 11 : i64} {
  func.func @_fused_kernel(%arg0: i32, %arg1: memref<1x8x256xf32, #tpu.memory_space<vmem>>, %arg2: memref<8x8xf32, #tpu.memory_space<vmem>>, %arg3: memref<8x1xf32, #tpu.memory_space<vmem>>, %arg4: memref<8x2xf32, #tpu.memory_space<vmem>>, %arg5: memref<8x2xf32, #tpu.memory_space<vmem>>, %arg6: memref<1x8x256xf32, #tpu.memory_space<vmem>>) attributes {dimension_semantics = [#tpu.dimension_semantics<parallel>], iteration_bounds = array<i64: 2>, scalar_prefetch = 0 : i64, scratch_operands = 0 : i64, tpu.core_type = #tpu.core_type<tc>, window_params = [{transform_indices = @transform_0, window_bounds = array<i64: 1, 8, 256>}, {pipeline_mode = #tpu.pipeline_mode<synchronous>, transform_indices = @transform_1, window_bounds = array<i64: 8, 8>}, {pipeline_mode = #tpu.pipeline_mode<synchronous>, transform_indices = @transform_2, window_bounds = array<i64: 8, 1>}, {pipeline_mode = #tpu.pipeline_mode<synchronous>, transform_indices = @transform_3, window_bounds = array<i64: 8, 2>}, {pipeline_mode = #tpu.pipeline_mode<synchronous>, transform_indices = @transform_4, window_bounds = array<i64: 8, 2>}, {transform_indices = @transform_5, window_bounds = array<i64: 1, 8, 256>}]} {
    %c0 = arith.constant 0 : index
    %c0_0 = arith.constant 0 : index
    %0 = vector.load %arg2[%c0, %c0_0] : memref<8x8xf32, #tpu.memory_space<vmem>>, vector<8x8xf32>
    %c0_1 = arith.constant 0 : index
    %c0_2 = arith.constant 0 : index
    %c0_3 = arith.constant 0 : index
    %1 = vector.load %arg1[%c0_1, %c0_2, %c0_3] : memref<1x8x256xf32, #tpu.memory_space<vmem>>, vector<1x8x256xf32>
    %2 = vector.shape_cast %1 : vector<1x8x256xf32> to vector<8x256xf32>
    %cst = arith.constant dense<0.000000e+00> : vector<8x256xf32>
    %3 = tpu.matmul %0, %2, %cst {dimension_numbers = #tpu.dot_dimension_numbers<[1], [0], [0], [1], [0, 0, 1, 1], [], []>} : vector<8x8xf32>, vector<8x256xf32>, vector<8x256xf32> -> vector<8x256xf32>
    %c0_4 = arith.constant 0 : index
    %c0_5 = arith.constant 0 : index
    %4 = vector.load %arg3[%c0_4, %c0_5] : memref<8x1xf32, #tpu.memory_space<vmem>>, vector<8x1xf32>
    %5 = vector.broadcast %4 : vector<8x1xf32> to vector<8x256xf32>
    %6 = arith.addf %3, %5 : vector<8x256xf32>
    %cst_6 = arith.constant dense<0.000000e+00> : vector<8xf32>
    %7 = vector.multi_reduction <add>, %6, %cst_6 [1] : vector<8x256xf32> to vector<8xf32>
    %8 = vector.shape_cast %7 : vector<8xf32> to vector<8x1xf32>
    %cst_7 = arith.constant 3.906250e-03 : f32
    %9 = vector.broadcast %cst_7 : f32 to vector<8x1xf32>
    %10 = arith.mulf %8, %9 : vector<8x1xf32>
    %cst_8 = arith.constant dense<0xFF800000> : vector<8xf32>
    %11 = vector.multi_reduction <maximumf>, %6, %cst_8 [1] : vector<8x256xf32> to vector<8xf32>
    %12 = vector.shape_cast %11 : vector<8xf32> to vector<8x1xf32>
    %c0_9 = arith.constant 0 : index
    %c0_10 = arith.constant 0 : index
    %13 = vector.load %arg4[%c0_9, %c0_10] : memref<8x2xf32, #tpu.memory_space<vmem>>, vector<8x2xf32>
    %14 = vector.broadcast %10 : vector<8x1xf32> to vector<8x2xf32>
    %15 = arith.mulf %13, %14 : vector<8x2xf32>
    %cst_11 = arith.constant dense<0.000000e+00> : vector<2xf32>
    %16 = vector.multi_reduction <add>, %15, %cst_11 [0] : vector<8x2xf32> to vector<2xf32>
    %17 = vector.shape_cast %16 : vector<2xf32> to vector<1x2xf32>
    %cst_12 = arith.constant 0.000000e+00 : f32
    %18 = vector.broadcast %cst_12 : f32 to vector<1x2xf32>
    %19 = arith.maximumf %17, %18 : vector<1x2xf32>
    %c0_13 = arith.constant 0 : index
    %c0_14 = arith.constant 0 : index
    %20 = vector.load %arg5[%c0_13, %c0_14] : memref<8x2xf32, #tpu.memory_space<vmem>>, vector<8x2xf32>
    %21 = vector.broadcast %19 : vector<1x2xf32> to vector<8x2xf32>
    %22 = arith.mulf %20, %21 : vector<8x2xf32>
    %cst_15 = arith.constant dense<0.000000e+00> : vector<8xf32>
    %23 = vector.multi_reduction <add>, %22, %cst_15 [1] : vector<8x2xf32> to vector<8xf32>
    %24 = vector.shape_cast %23 : vector<8xf32> to vector<8x1xf32>
    %c0_16 = arith.constant 0 : index
    %c0_17 = arith.constant 0 : index
    %25 = vector.load %arg4[%c0_16, %c0_17] : memref<8x2xf32, #tpu.memory_space<vmem>>, vector<8x2xf32>
    %26 = vector.broadcast %12 : vector<8x1xf32> to vector<8x2xf32>
    %27 = arith.mulf %25, %26 : vector<8x2xf32>
    %cst_18 = arith.constant dense<0.000000e+00> : vector<2xf32>
    %28 = vector.multi_reduction <add>, %27, %cst_18 [0] : vector<8x2xf32> to vector<2xf32>
    %29 = vector.shape_cast %28 : vector<2xf32> to vector<1x2xf32>
    %cst_19 = arith.constant 0.000000e+00 : f32
    %30 = vector.broadcast %cst_19 : f32 to vector<1x2xf32>
    %31 = arith.maximumf %29, %30 : vector<1x2xf32>
    %c0_20 = arith.constant 0 : index
    %c0_21 = arith.constant 0 : index
    %32 = vector.load %arg5[%c0_20, %c0_21] : memref<8x2xf32, #tpu.memory_space<vmem>>, vector<8x2xf32>
    %33 = vector.broadcast %31 : vector<1x2xf32> to vector<8x2xf32>
    %34 = arith.mulf %32, %33 : vector<8x2xf32>
    %cst_22 = arith.constant dense<0.000000e+00> : vector<8xf32>
    %35 = vector.multi_reduction <add>, %34, %cst_22 [1] : vector<8x2xf32> to vector<8xf32>
    %36 = vector.shape_cast %35 : vector<8xf32> to vector<8x1xf32>
    %37 = arith.addf %24, %36 : vector<8x1xf32>
    %38 = arith.negf %37 : vector<8x1xf32>
    %39 = math.exp %38 : vector<8x1xf32>
    %cst_23 = arith.constant 1.000000e+00 : f32
    %40 = vector.broadcast %cst_23 : f32 to vector<8x1xf32>
    %41 = arith.addf %40, %39 : vector<8x1xf32>
    %42 = arith.divf %40, %41 : vector<8x1xf32>
    %43 = vector.broadcast %42 : vector<8x1xf32> to vector<8x256xf32>
    %44 = arith.mulf %6, %43 : vector<8x256xf32>
    %c0_24 = arith.constant 0 : index
    %c0_25 = arith.constant 0 : index
    %c0_26 = arith.constant 0 : index
    %45 = vector.load %arg6[%c0_24, %c0_25, %c0_26] : memref<1x8x256xf32, #tpu.memory_space<vmem>>, vector<1x8x256xf32>
    %46 = vector.shape_cast %45 : vector<1x8x256xf32> to vector<8x256xf32>
    %47 = vector.shape_cast %44 : vector<8x256xf32> to vector<1x8x256xf32>
    tpu.vector_store %arg6[%c0_24, %c0_25, %c0_26], %47 {strides = array<i32>} : memref<1x8x256xf32, #tpu.memory_space<vmem>>, vector<1x8x256xf32>,
    return
  }
  func.func @transform_0(%arg0: i32) -> (i32, i32, i32) {
    %c0_i32 = arith.constant 0 : i32
    %c0_i32_0 = arith.constant 0 : i32
    %c0_i32_1 = arith.constant 0 : i32
    return %arg0, %c0_i32, %c0_i32_0 : i32, i32, i32
  }
  func.func @transform_1(%arg0: i32) -> (i32, i32) {
    %c0_i32 = arith.constant 0 : i32
    %c0_i32_0 = arith.constant 0 : i32
    %c0_i32_1 = arith.constant 0 : i32
    return %c0_i32, %c0_i32_0 : i32, i32
  }
  func.func @transform_2(%arg0: i32) -> (i32, i32) {
    %c0_i32 = arith.constant 0 : i32
    %c0_i32_0 = arith.constant 0 : i32
    %c0_i32_1 = arith.constant 0 : i32
    return %c0_i32, %c0_i32_0 : i32, i32
  }
  func.func @transform_3(%arg0: i32) -> (i32, i32) {
    %c0_i32 = arith.constant 0 : i32
    %c0_i32_0 = arith.constant 0 : i32
    %c0_i32_1 = arith.constant 0 : i32
    return %c0_i32, %c0_i32_0 : i32, i32
  }
  func.func @transform_4(%arg0: i32) -> (i32, i32) {
    %c0_i32 = arith.constant 0 : i32
    %c0_i32_0 = arith.constant 0 : i32
    %c0_i32_1 = arith.constant 0 : i32
    return %c0_i32, %c0_i32_0 : i32, i32
  }
  func.func @transform_5(%arg0: i32) -> (i32, i32, i32) {
    %c0_i32 = arith.constant 0 : i32
    %c0_i32_0 = arith.constant 0 : i32
    %c0_i32_1 = arith.constant 0 : i32
    return %arg0, %c0_i32, %c0_i32_0 : i32, i32, i32
  }
}

</mosaic_0001>

<llo_original>
// kernel: tpu_custom_call.1
$region0: #{tpu_custom_call.1}
  #allocation0 [shape = 'u32[]', space=smem, size = 0x4, offset = 0x4, fixed_abs, tag = 'smem constant byte address 0x4 - core index']
  #allocation1 [shape = 'u32[144,128]{1,0:T(1,128)}', space=vmem, size = 0x12000, scoped, tag = 'internal scratch']
  %s0 = inlined_call_operand.hbm [shape: f32[2,8,256], index: 0, kind: input, shape index: {}]
  %s1 = inlined_call_operand.vmem [shape: f32[8,8], index: 1, kind: input, shape index: {}]
  %s2 = inlined_call_operand.vmem [shape: f32[8,1], index: 2, kind: input, shape index: {}]
  %s3 = inlined_call_operand.vmem [shape: f32[8,2], index: 3, kind: input, shape index: {}]
  %s4 = inlined_call_operand.vmem [shape: f32[8,2], index: 4, kind: input, shape index: {}]
  %s5 = inlined_call_operand.hbm [shape: f32[2,8,256], index: 5, kind: output, shape index: {}]
  %s6 = sld [smem:[#allocation0]]
  $region57: #{tpu_custom_call.1} parent=0
    _
  %s8 = ssub.s32 1, %s6
  %s9 = scalar_select 0, %s8, %s6
  $region1: #{tpu_custom_call.1} parent=0
    #allocation2 [shape = 'u8[16384]{0}', space=vmem, size = 0x4000, scoped, tag = 'input window, operand 0']
    #allocation3 [shape = 's32[2]{0}', space=sflag, size = 0x8, scoped, tag = 'scoped memory for tpu_custom_call.1']
    #allocation4 [shape = 's32[2]{0}', space=sflag, size = 0x8, scoped, tag = 'scoped memory for tpu_custom_call.1']
    #allocation5 [shape = 'u8[16384]{0}', space=vmem, size = 0x4000, scoped, tag = 'output window, operand 0']
    %10 = vsyncpa [#allocation3], 0
    %s11 = scalar_lea.sflag [#allocation3], 1
    %12 = vsyncpa %s11, 0
    %13 = vsyncpa [#allocation4], 0
    %s14 = scalar_lea.sflag [#allocation4], 1
    %15 = vsyncpa %s14, 0
    loop: start=0, step=1, limit=4
    $region2: #{tpu_custom_call.1} parent=1 // loop_pre_header
      _
    $region3: #{tpu_custom_call.1} parent=1 // loop_header
      %s17 = sphi 0, %s21
      %p18 = scmp.ge.s32.totalorder %s17, 4
      %s27 = sphi 0, %s29
      %s30 = sphi 0, %s27
      %s31 = sphi 0, %s30
      %s47 = sphi 0, %s31
      %s51 = sphi 0, %s51
      %s53 = sphi 0, %s51
      %s54 = sphi 0, %s53
      %s68 = sphi 0, %s54
      %s72 = sphi 0, %s72
      %s74 = sphi 0, %s72
      %s75 = sphi 0, %s74
      %s89 = sphi 0, %s75
      %s93 = sphi 0, %s93
      %s95 = sphi 0, %s93
      %s96 = sphi 0, %s95
      %s110 = sphi 0, %s96
      %s114 = sphi 0, %s114
      %s116 = sphi 0, %s114
      %s117 = sphi 0, %s116
      %s131 = sphi 0, %s117
      %s137 = sphi 0, %s139
      %s140 = sphi 0, %s137
      %s141 = sphi 0, %s140
      %s157 = sphi 0, %s141
    $region4: #{tpu_custom_call.1} parent=1 // loop_header_branch
      %20 = sbr.rel (%p18) target = $region8
    $region5: #{tpu_custom_call.1} parent=1 // loop_body
      %s22 = ssub.s32 %s17, 1
      %s23 = ssub.s32 %s17, 2
      %s24 = sadd.s32 %s17, 1
      %s25 = ssub.s32 %s17, %s24
      %p26 = scmp.eq.s32.totalorder %s25, 0
      %s28 = sadd.s32 %s27, 1
      %s29 = scalar_select %p26, %s27, %s28
      %p32 = pneg %p26
      %p33 = scmp.eq.s32.totalorder %s17, 1
      %p34 = por %p32, %p33
      %p35 = scmp.ne.s32.totalorder %s27, %s30
      %p36 = scmp.eq.s32.totalorder %s17, 0
      %p37 = por %p35, %p36
      %p38 = scmp.ne.s32.totalorder %s27, %s30
      %p39 = scmp.eq.s32.totalorder %s22, 1
      %p40 = por %p38, %p39
      %p41 = scmp.ne.s32.totalorder %s30, %s31
      %p42 = scmp.eq.s32.totalorder %s22, 0
      %p43 = por %p41, %p42
      %p44 = scmp.ne.s32.totalorder %s30, %s31
      %p45 = scmp.eq.s32.totalorder %s23, 1
      %p46 = por %p44, %p45
      %p48 = scmp.ne.s32.totalorder %s31, %s47
      %p49 = scmp.eq.s32.totalorder %s23, 0
      %p50 = por %p48, %p49
      %s52 = sadd.s32 %s51, 1
      %p55 = scmp.eq.s32.totalorder %s17, 1
      %p56 = scmp.ne.s32.totalorder %s51, %s53
      %p57 = scmp.eq.s32.totalorder %s17, 0
      %p58 = por %p56, %p57
      %p59 = scmp.ne.s32.totalorder %s51, %s53
      %p60 = scmp.eq.s32.totalorder %s22, 1
      %p61 = por %p59, %p60
      %p62 = scmp.ne.s32.totalorder %s53, %s54
      %p63 = scmp.eq.s32.totalorder %s22, 0
      %p64 = por %p62, %p63
      %p65 = scmp.ne.s32.totalorder %s53, %s54
      %p66 = scmp.eq.s32.totalorder %s23, 1
      %p67 = por %p65, %p66
      %p69 = scmp.ne.s32.totalorder %s54, %s68
      %p70 = scmp.eq.s32.totalorder %s23, 0
      %p71 = por %p69, %p70
      %s73 = sadd.s32 %s72, 1
      %p76 = scmp.eq.s32.totalorder %s17, 1
      %p77 = scmp.ne.s32.totalorder %s72, %s74
      %p78 = scmp.eq.s32.totalorder %s17, 0
      %p79 = por %p77, %p78
      %p80 = scmp.ne.s32.totalorder %s72, %s74
      %p81 = scmp.eq.s32.totalorder %s22, 1
      %p82 = por %p80, %p81
      %p83 = scmp.ne.s32.totalorder %s74, %s75
      %p84 = scmp.eq.s32.totalorder %s22, 0
      %p85 = por %p83, %p84
      %p86 = scmp.ne.s32.totalorder %s74, %s75
      %p87 = scmp.eq.s32.totalorder %s23, 1
      %p88 = por %p86, %p87
      %p90 = scmp.ne.s32.totalorder %s75, %s89
      %p91 = scmp.eq.s32.totalorder %s23, 0
      %p92 = por %p90, %p91
      %s94 = sadd.s32 %s93, 1
      %p97 = scmp.eq.s32.totalorder %s17, 1
      %p98 = scmp.ne.s32.totalorder %s93, %s95
      %p99 = scmp.eq.s32.totalorder %s17, 0
      %p100 = por %p98, %p99
      %p101 = scmp.ne.s32.totalorder %s93, %s95
      %p102 = scmp.eq.s32.totalorder %s22, 1
      %p103 = por %p101, %p102
      %p104 = scmp.ne.s32.totalorder %s95, %s96
      %p105 = scmp.eq.s32.totalorder %s22, 0
      %p106 = por %p104, %p105
      %p107 = scmp.ne.s32.totalorder %s95, %s96
      %p108 = scmp.eq.s32.totalorder %s23, 1
      %p109 = por %p107, %p108
      %p111 = scmp.ne.s32.totalorder %s96, %s110
      %p112 = scmp.eq.s32.totalorder %s23, 0
      %p113 = por %p111, %p112
      %s115 = sadd.s32 %s114, 1
      %p118 = scmp.eq.s32.totalorder %s17, 1
      %p119 = scmp.ne.s32.totalorder %s114, %s116
      %p120 = scmp.eq.s32.totalorder %s17, 0
      %p121 = por %p119, %p120
      %p122 = scmp.ne.s32.totalorder %s114, %s116
      %p123 = scmp.eq.s32.totalorder %s22, 1
      %p124 = por %p122, %p123
      %p125 = scmp.ne.s32.totalorder %s116, %s117
      %p126 = scmp.eq.s32.totalorder %s22, 0
      %p127 = por %p125, %p126
      %p128 = scmp.ne.s32.totalorder %s116, %s117
      %p129 = scmp.eq.s32.totalorder %s23, 1
      %p130 = por %p128, %p129
      %p132 = scmp.ne.s32.totalorder %s117, %s131
      %p133 = scmp.eq.s32.totalorder %s23, 0
      %p134 = por %p132, %p133
      %s135 = ssub.s32 %s17, %s24
      %p136 = scmp.eq.s32.totalorder %s135, 0
      %s138 = sadd.s32 %s137, 1
      %s139 = scalar_select %p136, %s137, %s138
      %p142 = pneg %p136
      %p143 = scmp.eq.s32.totalorder %s17, 1
      %p144 = por %p142, %p143
      %p145 = scmp.ne.s32.totalorder %s137, %s140
      %p146 = scmp.eq.s32.totalorder %s17, 0
      %p147 = por %p145, %p146
      %p148 = scmp.ne.s32.totalorder %s137, %s140
      %p149 = scmp.eq.s32.totalorder %s22, 1
      %p150 = por %p148, %p149
      %p151 = scmp.ne.s32.totalorder %s140, %s141
      %p152 = scmp.eq.s32.totalorder %s22, 0
      %p153 = por %p151, %p152
      %p154 = scmp.ne.s32.totalorder %s140, %s141
      %p155 = scmp.eq.s32.totalorder %s23, 1
      %p156 = por %p154, %p155
      %p158 = scmp.ne.s32.totalorder %s141, %s157
      %p159 = scmp.eq.s32.totalorder %s23, 0
      %p160 = por %p158, %p159
      %p161 = scmp.le.s32.totalorder 1, %s17
      %p162 = scmp.lt.s32.totalorder %s17, 3
      %p163 = pnand %p161, %p162
      %p164 = pneg %p163
      // Predicated region
      $region9: #{tpu_custom_call.1} parent=5 // pred_check
        _
      $region10: #{tpu_custom_call.1} parent=5 // pred_check_branch
        %166 = sbr.rel (%p163) target = $region12
      $region11: #{tpu_custom_call.1} parent=5 // pred_region
        %s167 = ssub.s32 %s17, 1
        // Predicated region
        $region13: #{tpu_custom_call.1} parent=11 // pred_check
          %p168 = pneg %p64
        $region14: #{tpu_custom_call.1} parent=11 // pred_check_branch
          %170 = sbr.rel (%p168) target = $region16
        $region15: #{tpu_custom_call.1} parent=11 // pred_region
          _
        $region16: #{tpu_custom_call.1} parent=11 // pred_fallthru
          _
        // Predicated region
        $region17: #{tpu_custom_call.1} parent=11 // pred_check
          %p171 = pneg %p85
        $region18: #{tpu_custom_call.1} parent=11 // pred_check_branch
          %173 = sbr.rel (%p171) target = $region20
        $region19: #{tpu_custom_call.1} parent=11 // pred_region
          _
        $region20: #{tpu_custom_call.1} parent=11 // pred_fallthru
          _
        // Predicated region
        $region21: #{tpu_custom_call.1} parent=11 // pred_check
          %p174 = pneg %p106
        $region22: #{tpu_custom_call.1} parent=11 // pred_check_branch
          %176 = sbr.rel (%p174) target = $region24
        $region23: #{tpu_custom_call.1} parent=11 // pred_region
          _
        $region24: #{tpu_custom_call.1} parent=11 // pred_fallthru
          _
        // Predicated region
        $region25: #{tpu_custom_call.1} parent=11 // pred_check
          %p177 = pneg %p127
        $region26: #{tpu_custom_call.1} parent=11 // pred_check_branch
          %179 = sbr.rel (%p177) target = $region28
        $region27: #{tpu_custom_call.1} parent=11 // pred_region
          _
        $region28: #{tpu_custom_call.1} parent=11 // pred_fallthru
          _
      $region12: #{tpu_custom_call.1} parent=5 // pred_fallthru
        _
      %p180 = scmp.lt.s32.totalorder %s17, 2
      // Predicated region
      $region29: #{tpu_custom_call.1} parent=5 // pred_check
        %p181 = pneg %p180
      $region30: #{tpu_custom_call.1} parent=5 // pred_check_branch
        %183 = sbr.rel (%p181) target = $region32
      $region31: #{tpu_custom_call.1} parent=5 // pred_region
        // Predicated region
        $region33: #{tpu_custom_call.1} parent=31 // pred_check
          %p184 = pneg %p37
        $region34: #{tpu_custom_call.1} parent=31 // pred_check_branch
          %186 = sbr.rel (%p184) target = $region36
        $region35: #{tpu_custom_call.1} parent=31 // pred_region
          %s187 = sand.u32 %s27, 1
          %s188 = scalar_lea.sflag [#allocation3], %s187
          %s189 = sand.u32 %s27, 1
          %s190 = smul.addr %s189, 16
          %s191 = scalar_lea.vmem [#allocation2], %s190
          %s193 = ssub.s32 256, 256
          %194 = vsyncadd %s188, %s193
          %s195 = smul.addr %s17, 2
          %s196 = smul.addr %s195, 128
          %s197 = scalar_lea.hbm %s0, %s196
          %s199 = sshll.u32 %s191, 4
          %s200 = int_to_ptr.vmem [resolvable:$true] %s199
          %202 = dma.hbm_to_vmem [thread:$0]  %s197, 256, %s200, %s188
        $region36: #{tpu_custom_call.1} parent=31 // pred_fallthru
          _
      $region32: #{tpu_custom_call.1} parent=5 // pred_fallthru
        _
      %p203 = scmp.le.s32.totalorder 1, %s17
      %p204 = scmp.lt.s32.totalorder %s17, 3
      %p205 = pnand %p203, %p204
      %p206 = pneg %p205
      // Predicated region
      $region37: #{tpu_custom_call.1} parent=5 // pred_check
        _
      $region38: #{tpu_custom_call.1} parent=5 // pred_check_branch
        %208 = sbr.rel (%p205) target = $region40
      $region39: #{tpu_custom_call.1} parent=5 // pred_region
        %s209 = ssub.s32 %s17, 1
        %s210 = sand.u32 %s30, 1
        %s211 = scalar_lea.sflag [#allocation3], %s210
        %s212 = sand.u32 %s30, 1
        %s213 = smul.addr %s212, 16
        %s214 = scalar_lea.vmem [#allocation2], %s213
        // Predicated region
        $region41: #{tpu_custom_call.1} parent=39 // pred_check
          %p215 = pneg %p43
        $region42: #{tpu_custom_call.1} parent=39 // pred_check_branch
          %217 = sbr.rel (%p215) target = $region44
        $region43: #{tpu_custom_call.1} parent=39 // pred_region
          %218 = dma.done %s211, 256
        $region44: #{tpu_custom_call.1} parent=39 // pred_fallthru
          _
        %s219 = sand.u32 %s30, 1
        %s220 = scalar_lea.sflag [#allocation3], %s219
        %s221 = sand.u32 %s30, 1
        %s222 = smul.addr %s221, 16
        %s223 = scalar_lea.vmem [#allocation2], %s222
        %p224 = pneg %p43
        %p225 = pneg %p40
        %p226 = pneg %p64
        %p227 = pneg %p61
        %p228 = pneg %p85
        %p229 = pneg %p82
        %p230 = pneg %p106
        %p231 = pneg %p103
        %p232 = pneg %p127
        %p233 = pneg %p124
        %p234 = pneg %p153
        %p235 = pneg %p150
        %s236 = sand.u32 %s140, 1
        %s237 = scalar_lea.sflag [#allocation4], %s236
        %s238 = sand.u32 %s140, 1
        %s239 = smul.addr %s238, 16
        %s240 = scalar_lea.vmem [#allocation5], %s239
        %v241 = vld [vmem:[%s1] sm:$0xff]
        %v242 = vld [vmem:[%s214] sm:$0xff]
        %v243 = vld [vmem:[%s214 + $0x8] sm:$0xff]
        %v244 = vld [vmem:[%s2] sm:$0xff]
        %246 = vset.pattern.permute.xlu0 0
        %247 = vperm.xlu0 %246, %v244
        %v248 = vpop.permute.xlu0 %247
        %vm250 = vcmask 64512
        %v252 = vsel %vm250, %v241, 0
        %254 = vmatprep.subr.mxu0 0.0
        %255 = vmatpush1.msra.mxu0 0.0
        %256 = vmatprep.subr.mxu0 0.0
        %257 = vmatpush1.msra.mxu0 0.0
        %258 = vmatprep.subr.mxu0 0.0
        %259 = vmatpush1.msra.mxu0 0.0
        %260 = vmatprep.subr.mxu0 0.0
        %261 = vmatpush1.msra.mxu0 0.0
        %262 = vmatprep.subr.mxu0 0.0
        %263 = vmatpush1.msra.mxu0 0.0
        %264 = vmatprep.subr.mxu0 0.0
        %265 = vmatpush1.msra.mxu0 0.0
        %266 = vmatprep.subr.mxu0 0.0
        %267 = vmatpush1.msra.mxu0 0.0
        %268 = vmatprep.subr.mxu0 0.0
        %269 = vmatpush1.msra.mxu0 0.0
        %270 = vmatprep.subr.mxu0 0.0
        %271 = vmatpush1.msra.mxu0 0.0
        %272 = vmatprep.subr.mxu0 0.0
        %273 = vmatpush1.msra.mxu0 0.0
        %274 = vmatprep.subr.mxu0 0.0
        %275 = vmatpush1.msra.mxu0 0.0
        %276 = vmatprep.subr.mxu0 0.0
        %277 = vmatpush1.msra.mxu0 0.0
        %278 = vmatprep.subr.mxu0 0.0
        %279 = vmatpush1.msra.mxu0 0.0
        %280 = vmatprep.subr.mxu0 0.0
        %281 = vmatpush1.msra.mxu0 0.0
        %282 = vmatprep.subr.mxu0 0.0
        %283 = vmatpush1.msra.mxu0 0.0
        %284 = vmatprep.subr.mxu0 %v243
        %285 = vmatpush1.msra.mxu0 %v242
        %286 = vmatprep.subr.mxu0 0.0
        %287 = vmatpush2.msra.mxu0 0.0
        %288 = vmatprep.subr.mxu0 0.0
        %289 = vmatpush2.msra.mxu0 0.0
        %290 = vmatprep.subr.mxu0 0.0
        %291 = vmatpush2.msra.mxu0 0.0
        %292 = vmatprep.subr.mxu0 0.0
        %293 = vmatpush2.msra.mxu0 0.0
        %294 = vmatprep.subr.mxu0 0.0
        %295 = vmatpush2.msra.mxu0 0.0
        %296 = vmatprep.subr.mxu0 0.0
        %297 = vmatpush2.msra.mxu0 0.0
        %298 = vmatprep.subr.mxu0 0.0
        %299 = vmatpush2.msra.mxu0 0.0
        %300 = vmatprep.subr.mxu0 0.0
        %301 = vmatpush2.msra.mxu0 0.0
        %302 = vmatprep.subr.mxu0 0.0
        %303 = vmatpush2.msra.mxu0 0.0
        %304 = vmatprep.subr.mxu0 0.0
        %305 = vmatpush2.msra.mxu0 0.0
        %306 = vmatprep.subr.mxu0 0.0
        %307 = vmatpush2.msra.mxu0 0.0
        %308 = vmatprep.subr.mxu0 0.0
        %309 = vmatpush2.msra.mxu0 0.0
        %310 = vmatprep.subr.mxu0 0.0
        %311 = vmatpush2.msra.mxu0 0.0
        %312 = vmatprep.subr.mxu0 0.0
        %313 = vmatpush2.msra.mxu0 0.0
        %314 = vmatprep.subr.mxu0 0.0
        %315 = vmatpush2.msra.mxu0 0.0
        %316 = vmatprep.subr.mxu0 0.0
        %317 = vmatpush2.msra.mxu0 0.0
        %318 = vmatprep.mubr.f32.mxu0 0.0
        %319 = vmatmul.mubr.f32.gmra.mxu0 %v252
        %v320 = vpop.f32.mrf.mxu0
        %v321 = vadd.f32 %v248, %v320
        %v322 = vpop.f32.mrf.mxu0
        %v323 = vadd.f32 %v248, %v322
        %324 = vdwg.mxu0
        %v325 = vadd.f32 %v321, %v323
        %326 = vadd.xlane.f32.xlu0 %v325
        %v327 = vpop.xlane.xlu0 %326
        %v328 = vmul.f32 %v327, 0.00390625
        %v329 = vmax.f32 %v321, %v323
        %330 = vmax.xlane.f32.xlu0 %v329
        %v331 = vpop.xlane.xlu0 %330
        %v332 = vld [vmem:[%s3] sm:$0xff]
        %v333 = vmul.f32 %v332, %v328
        %vm334 = vcmask 15360
        %v335 = vsel %vm334, %v333, 0.0
        %v336 = vrot.slane %v335, 4
        %v337 = vadd.f32 %v335, %v336
        %v338 = vrot.slane %v337, 2
        %v339 = vadd.f32 %v337, %v338
        %v340 = vrot.slane %v339, 1
        %v341 = vadd.f32 %v339, %v340
        %v342 = vmax.f32 %v341, 0.0
        %v343 = vld [vmem:[%s4] sm:$0xff]
        %v344 = vmul.f32 %v343, %v342
        %v345 = vsel %vm334, %v344, 0.0
        %346 = vadd.xlane.f32.xlu0 %v345
        %v347 = vpop.xlane.xlu0 %346
        %v348 = vmul.f32 %v332, %v331
        %v349 = vsel %vm334, %v348, 0.0
        %v350 = vrot.slane %v349, 4
        %v351 = vadd.f32 %v349, %v350
        %v352 = vrot.slane %v351, 2
        %v353 = vadd.f32 %v351, %v352
        %v354 = vrot.slane %v353, 1
        %v355 = vadd.f32 %v353, %v354
        %v356 = vmax.f32 %v355, 0.0
        %v357 = vmul.f32 %v343, %v356
        %v358 = vsel %vm334, %v357, 0.0
        %359 = vadd.xlane.f32.xlu0 %v358
        %v360 = vpop.xlane.xlu0 %359
        %v361 = vadd.f32 %v347, %v360
        %v362 = vxor.u32 %v361, 2147483648
        %v363 = vmul.f32 %v362, 1.442695
        %v364 = vpow.pop %v363
        %v365 = vadd.f32 %v364, 1.0
        %v366 = vrcp.pop %v365
        %v367 = vmul.f32 1.0, %v366
        %v368 = vmul.f32 %v321, %v367
        %v369 = vmul.f32 %v323, %v367
        %370 = vst [vmem:[%s240] sm:$0xff] %v368
        %371 = vst [vmem:[%s240 + $0x8] sm:$0xff] %v369
        %s372 = sand.u32 %s140, 1
        %s373 = scalar_lea.sflag [#allocation4], %s372
        %s374 = sand.u32 %s140, 1
        %s375 = smul.addr %s374, 16
        %s376 = scalar_lea.vmem [#allocation5], %s375
        // Predicated region
        $region45: #{tpu_custom_call.1} parent=39 // pred_check
          %p377 = pneg %p150
        $region46: #{tpu_custom_call.1} parent=39 // pred_check_branch
          %379 = sbr.rel (%p377) target = $region48
        $region47: #{tpu_custom_call.1} parent=39 // pred_region
          %s381 = ssub.s32 256, 256
          %382 = vsyncadd %s373, %s381
          %s383 = smul.addr %s22, 2
          %s384 = smul.addr %s383, 128
          %s385 = scalar_lea.hbm %s5, %s384
          %s387 = sshll.u32 %s376, 4
          %s388 = int_to_ptr.vmem [resolvable:$true] %s387
          %390 = dma.vmem_to_hbm [thread:$0]  %s388, 256, %s385, %s373
        $region48: #{tpu_custom_call.1} parent=39 // pred_fallthru
          _
      $region40: #{tpu_custom_call.1} parent=5 // pred_fallthru
        _
      %p391 = scmp.le.s32.totalorder 2, %s17
      // Predicated region
      $region49: #{tpu_custom_call.1} parent=5 // pred_check
        %p392 = pneg %p391
      $region50: #{tpu_custom_call.1} parent=5 // pred_check_branch
        %394 = sbr.rel (%p392) target = $region52
      $region51: #{tpu_custom_call.1} parent=5 // pred_region
        %s395 = ssub.s32 %s17, 2
        // Predicated region
        $region53: #{tpu_custom_call.1} parent=51 // pred_check
          %p396 = pneg %p156
        $region54: #{tpu_custom_call.1} parent=51 // pred_check_branch
          %398 = sbr.rel (%p396) target = $region56
        $region55: #{tpu_custom_call.1} parent=51 // pred_region
          %s399 = sand.u32 %s141, 1
          %s400 = scalar_lea.sflag [#allocation4], %s399
          %s401 = sand.u32 %s141, 1
          %s402 = smul.addr %s401, 16
          %s403 = scalar_lea.vmem [#allocation5], %s402
          %404 = dma.done %s400, 256
        $region56: #{tpu_custom_call.1} parent=51 // pred_fallthru
          _
      $region52: #{tpu_custom_call.1} parent=5 // pred_fallthru
        _
    $region6: #{tpu_custom_call.1} parent=1 // loop_footer
      %s21 = sadd.s32 1, %s17
    $region7: #{tpu_custom_call.1} parent=1 // loop_footer_branch
      %16 = sbr.rel target = $region3
    $region8: #{tpu_custom_call.1} parent=1 // loop_exit
      _
    %405 = vsyncpa [#allocation3], 1
    %s406 = scalar_lea.sflag [#allocation3], 1
    %407 = vsyncpa %s406, 1
    %408 = vsyncpa [#allocation4], 1
    %s409 = scalar_lea.sflag [#allocation4], 1
    %410 = vsyncpa %s409, 1

</llo_original>
